<compile_context>
chip_gen: v7x
topology: tpu7x:2x2x1
jax: 0.10.0
libtpu: 0.0.40
codegen_flags: <defaults>
</compile_context>

<pallas_src>
import jax
import jax.numpy as jnp
from jax.experimental import pallas as pl
from jax.experimental.pallas import tpu as pltpu

_LANE = 128


def _round_up(n, m):
    return ((n + m - 1) // m) * m


def _divisor_tile(total, align, target, min_tiles=1):
    """Largest multiple of `align` that divides `total`, is <= ~target, and leaves at
    least `min_tiles` tiles. `total` must itself be a multiple of `align`."""
    m = total // align
    if m < min_tiles:
        min_tiles = 1
    cap = min(max(target // align, 1), max(m // min_tiles, 1))
    d = cap
    while m % d:
        d -= 1
    return d * align


def _sigmoid(x):
    # sigmoid(x) = 0.5 * tanh(x/2) + 0.5 : a single EUP push (tanh) instead of two
    # (exp + reciprocal); the mul/add go to the VPU which has slack. Exact math,
    # so the f32 path carries no approx-reciprocal error.
    return 0.5 * jnp.tanh(0.5 * x) + 0.5


# ----------------------------------------------------------------------------------
# Kernels
# ----------------------------------------------------------------------------------
def mlp_resident_kernel(x_ref, w1_ref, b1_ref, w2_ref, b2_ref, w3_ref, b3_ref, o_ref):
    """All weights resident in VMEM; one fused MLP evaluation per batch tile."""
    x = x_ref[...].astype(w1_ref.dtype)
    h1 = _sigmoid(jnp.dot(x, w1_ref[...], preferred_element_type=jnp.float32)
                  + b1_ref[...])
    h2 = _sigmoid(jnp.dot(h1.astype(w2_ref.dtype), w2_ref[...],
                          preferred_element_type=jnp.float32) + b2_ref[...])
    h3 = jnp.dot(h2.astype(w3_ref.dtype), w3_ref[...],
                 preferred_element_type=jnp.float32)
    o_ref[...] = _sigmoid(h3 + b3_ref[...]).astype(o_ref.dtype)


def mlp_stream_kernel(x_ref, w1_ref, b1_ref, w2_ref, b2_ref, w3_ref, b3_ref,
                      o_ref, acc_ref):
    """W1/b1/W2 streamed in H1-column tiles along the trailing ("arbitrary") grid axis;
    partial layer-2 pre-activations accumulate in f32 VMEM scratch."""
    j = pl.program_id(1)

    @pl.when(j == 0)
    def _():
        acc_ref[...] = jnp.zeros_like(acc_ref)

    x = x_ref[...].astype(w1_ref.dtype)
    # Padded H1 lanes give sigmoid(0) = 0.5, but the matching W2 rows are zero-padded,
    # so they contribute nothing downstream.
    h1 = _sigmoid(jnp.dot(x, w1_ref[...], preferred_element_type=jnp.float32)
                  + b1_ref[...])
    acc_ref[...] += jnp.dot(h1.astype(w2_ref.dtype), w2_ref[...],
                            preferred_element_type=jnp.float32)

    @pl.when(j == pl.num_programs(1) - 1)
    def _():
        h2 = _sigmoid(acc_ref[...] + b2_ref[...])
        h3 = jnp.dot(h2.astype(w3_ref.dtype), w3_ref[...],
                     preferred_element_type=jnp.float32)
        o_ref[...] = _sigmoid(h3 + b3_ref[...]).astype(o_ref.dtype)


# ----------------------------------------------------------------------------------
# Parameter prep (one-time, NOT in the per-call hot path)
# ----------------------------------------------------------------------------------
def prepare_params(params, matmul_dtype=jnp.bfloat16):
    """Transpose PyTorch (out, in) -> (in, out), zero-pad feature dims to multiples of
    128 (lane-dense MXU tiles / unmasked stores), cast matmul operands to
    `matmul_dtype` (bf16 default). Biases and all elementwise math stay f32.

    Padding is exact: padded hidden units evaluate to sigmoid(0)=0.5 but hit zero
    weight rows downstream; padded output lanes are sliced off in the wrapper."""
    w1, b1 = params["w1"], params["b1"]      # (4D, D),   (4D,)
    w2, b2 = params["w2"], params["b2"]      # (16, 4D),  (16,)
    w3, b3 = params["w3"], params["b3"]      # (out, 16), (out,)

    d_in = w1.shape[1]
    h1, h2, d_out = w1.shape[0], w2.shape[0], w3.shape[0]
    h1p = _round_up(h1, _LANE)
    h2p = _round_up(h2, _LANE)
    outp = _round_up(d_out, _LANE)

    def pad2(a, rows, cols):
        return jnp.pad(a, ((0, rows - a.shape[0]), (0, cols - a.shape[1])))

    return {
        "w1": pad2(w1.T, d_in, h1p).astype(matmul_dtype),
        "w2": pad2(w2.T, h1p, h2p).astype(matmul_dtype),
        "w3": pad2(w3.T, h2p, outp).astype(matmul_dtype),
        "b1": jnp.pad(b1, (0, h1p - h1)).astype(jnp.float32)[None, :],
        "b2": jnp.pad(b2, (0, h2p - h2)).astype(jnp.float32)[None, :],
        "b3": jnp.pad(b3, (0, outp - d_out)).astype(jnp.float32)[None, :],
        "d_out": int(d_out),
    }


# ----------------------------------------------------------------------------------
# Forward wrapper
# ----------------------------------------------------------------------------------
def neural_net_work_forward(x, prepped, *, block_b=512, out_dtype=None,
                            stream_h1_tile=512, force_stream=False):
    """Forward pass. `x` is (batch, input_dim); `prepped` comes from prepare_params."""
    B, d_in = x.shape
    w1, w2, w3 = prepped["w1"], prepped["w2"], prepped["w3"]
    b1, b2, b3 = prepped["b1"], prepped["b2"], prepped["b3"]
    d_out = prepped["d_out"]
    h1p, h2p, outp = w1.shape[1], w2.shape[1], w3.shape[1]
    assert w1.shape[0] == d_in, "input feature dim does not match prepared params"

    out_dtype = x.dtype if out_dtype is None else jnp.dtype(out_dtype)
    w_itemsize = jnp.dtype(w1.dtype).itemsize
    x_itemsize = jnp.dtype(x.dtype).itemsize
    o_itemsize = jnp.dtype(out_dtype).itemsize

    # ---- batch tiling -------------------------------------------------------------
    # bf16 matmul operands pack 16 rows per vreg; f32 packs 8.
    sub_align = 16 if w_itemsize == 2 else 8
    b_pad = _round_up(B, sub_align)
    # bb divides b_pad (no oversize batch padding) and, whenever the batch allows,
    # leaves >= 2 grid steps: v7x megacore split + DMA/compute overlap everywhere.
    min_tiles = 2 if b_pad >= 2 * sub_align else 1
    bb = _divisor_tile(b_pad, sub_align, block_b, min_tiles)
    if b_pad != B:
        x = jnp.pad(x, ((0, b_pad - B), (0, 0)))   # at most sub_align-1 extra rows
    n_b = b_pad // bb

    # ---- VMEM budgeting / path selection -------------------------------------------
    w_bytes = ((w1.size + w2.size + w3.size) * w_itemsize
               + (b1.size + b2.size + b3.size) * 4)
    io_bytes = 2 * bb * (d_in * x_itemsize + outp * o_itemsize)   # double-buffered I/O
    # Pallas double-buffers every input BlockSpec (even index_map == const), so the
    # resident scheme really costs 2x w_bytes. Stream W1/W2 once that stops fitting
    # comfortably inside v7x's 64 MiB/TC.
    use_stream = force_stream or (2 * w_bytes > (24 << 20))

    if not use_stream:
        interm_bytes = bb * (h1p + h2p + outp) * 4
        vmem_bytes = int(1.4 * (2 * w_bytes + io_bytes + interm_bytes)) + (2 << 20)
        vmem_bytes = max(min(vmem_bytes, 48 << 20), 16 << 20)

        def resident(shape):
            # Same block (0, 0) every grid step -> stays in VMEM, no re-DMA.
            return pl.BlockSpec(shape, lambda i: (0,) * len(shape))

        out = pl.pallas_call(
            mlp_resident_kernel,
            out_shape=jax.ShapeDtypeStruct((b_pad, outp), out_dtype),
            grid=(n_b,),
            in_specs=[
                pl.BlockSpec((bb, d_in), lambda i: (i, 0)),      # batch-tiled input
                resident(w1.shape), resident(b1.shape),
                resident(w2.shape), resident(b2.shape),
                resident(w3.shape), resident(b3.shape),
            ],
            out_specs=pl.BlockSpec((bb, outp), lambda i: (i, 0)),
            compiler_params=pltpu.CompilerParams(
                dimension_semantics=("parallel",),
                vmem_limit_bytes=vmem_bytes,
            ),
        )(x, w1, b1, w2, b2, w3, b3)
    else:
        # Streaming fallback: tile W1/b1 columns and W2 rows by th1 over a trailing
        # "arbitrary" grid axis; accumulate layer-2 pre-activations in VMEM scratch.
        th1 = _divisor_tile(h1p, _LANE, stream_h1_tile, 1)
        n_j = h1p // th1
        stream_bytes = 2 * ((d_in * th1 + th1 * h2p) * w_itemsize + th1 * 4)
        res_bytes = 2 * (h2p * outp * w_itemsize + (h2p + outp) * 4)
        interm_bytes = bb * (th1 + 2 * h2p + outp) * 4
        vmem_bytes = int(1.4 * (stream_bytes + res_bytes + io_bytes + interm_bytes)) \
            + (2 << 20)
        vmem_bytes = max(min(vmem_bytes, 48 << 20), 16 << 20)

        out = pl.pallas_call(
            mlp_stream_kernel,
            out_shape=jax.ShapeDtypeStruct((b_pad, outp), out_dtype),
            grid=(n_b, n_j),
            in_specs=[
                pl.BlockSpec((bb, d_in), lambda i, j: (i, 0)),   # same x block over j
                pl.BlockSpec((d_in, th1), lambda i, j: (0, j)),  # W1 column tiles
                pl.BlockSpec((1, th1), lambda i, j: (0, j)),     # b1 tiles
                pl.BlockSpec((th1, h2p), lambda i, j: (j, 0)),   # W2 row tiles
                pl.BlockSpec((1, h2p), lambda i, j: (0, 0)),     # b2 resident
                pl.BlockSpec((h2p, outp), lambda i, j: (0, 0)),  # W3 resident
                pl.BlockSpec((1, outp), lambda i, j: (0, 0)),    # b3 resident
            ],
            out_specs=pl.BlockSpec((bb, outp), lambda i, j: (i, 0)),
            scratch_shapes=[pltpu.VMEM((bb, h2p), jnp.float32)],
            compiler_params=pltpu.CompilerParams(
                dimension_semantics=("parallel", "arbitrary"),
                vmem_limit_bytes=vmem_bytes,
            ),
        )(x, w1, b1, w2, b2, w3, b3)

    if b_pad != B or outp != d_out:
        out = out[:B, :d_out]
    return out


# ----------------------------------------------------------------------------------
# Init + pure-JAX reference
# ----------------------------------------------------------------------------------
def init_params(key, input_dim, output_dim):
    """Deterministic init matching the nn.Linear shapes in __init__ (PyTorch layout)."""
    h1, h2 = 4 * input_dim, 16
    ks = jax.random.split(key, 6)

    def uniform(k, shape, fan_in):
        bound = 1.0 / jnp.sqrt(float(fan_in))
        return jax.random.uniform(k, shape, jnp.float32, -bound, bound)

    return {
        "w1": uniform(ks[0], (h1, input_dim), input_dim),
        "b1": uniform(ks[1], (h1,), input_dim),
        "w2": uniform(ks[2], (h2, h1), h1),
        "b2": uniform(ks[3], (h2,), h1),
        "w3": uniform(ks[4], (output_dim, h2), h2),
        "b3": uniform(ks[5], (output_dim,), h2),
    }


def reference_forward(x, p):
    """Pure-JAX reference (PyTorch semantics: y = sigmoid(x @ W.T + b), three times)."""
    h = jax.nn.sigmoid(x @ p["w1"].T + p["b1"])
    h = jax.nn.sigmoid(h @ p["w2"].T + p["b2"])
    return jax.nn.sigmoid(h @ p["w3"].T + p["b3"])


# TODO(synk): set_weight/get_weight/save_model are host-side parameter management /
# serialization in the PyTorch module; they have no kernel equivalent (handled by the
# params dict + prepare_params here).

if __name__ == "__main__":
    key = jax.random.PRNGKey(0)
    k_p1, k_p2, k_x1, k_x2 = jax.random.split(key, 4)

    # --- Test 1: resident-weight path --------------------------------------------
    batch, input_dim, output_dim = 8, 32, 8
    params = init_params(k_p1, input_dim, output_dim)
    x = jax.random.normal(k_x1, (batch, input_dim), dtype=jnp.float32)
    ref = reference_forward(x, params)

    # Default fast path: bf16 matmul operands, f32 accumulation / bias / sigmoid.
    prepped_bf16 = prepare_params(params, matmul_dtype=jnp.bfloat16)
    out_bf16 = jax.block_until_ready(neural_net_work_forward(x, prepped_bf16))
    assert out_bf16.shape == (batch, output_dim)
    assert jnp.allclose(out_bf16, ref, atol=3e-2, rtol=3e-2)

    # Full-f32 path (exact tanh-form sigmoid) for a tight numerics check.
    prepped_f32 = prepare_params(params, matmul_dtype=jnp.float32)
    out_f32 = jax.block_until_ready(neural_net_work_forward(x, prepped_f32))
    assert out_f32.shape == (batch, output_dim)
    assert jnp.allclose(out_f32, ref, atol=1e-3, rtol=1e-3)

    # --- Test 2: streaming (W1/W2-tiled) fallback path, forced at small size ------
    # Ragged batch (40 rows -> 5 batch tiles of 8) x 2 H1 tiles of 128.
    batch2, input_dim2, output_dim2 = 40, 64, 8
    params2 = init_params(k_p2, input_dim2, output_dim2)
    x2 = jax.random.normal(k_x2, (batch2, input_dim2), dtype=jnp.float32)
    ref2 = reference_forward(x2, params2)

    prepped2 = prepare_params(params2, matmul_dtype=jnp.float32)
    out2 = jax.block_until_ready(
        neural_net_work_forward(x2, prepped2, force_stream=True, stream_h1_tile=128))
    assert out2.shape == (batch2, output_dim2)
    assert jnp.allclose(out2, ref2, atol=1e-3, rtol=1e-3)

    print("KERNEL_OK")
</pallas_src>

<mosaic_0001>
module attributes {stable_mosaic.version = 11 : i64} {
  func.func @mlp_resident_kernel(%arg0: i32, %arg1: memref<16x32xf32, #tpu.memory_space<vmem>>, %arg2: memref<32x128xbf16, #tpu.memory_space<vmem>>, %arg3: memref<1x128xf32, #tpu.memory_space<vmem>>, %arg4: memref<128x128xbf16, #tpu.memory_space<vmem>>, %arg5: memref<1x128xf32, #tpu.memory_space<vmem>>, %arg6: memref<128x128xbf16, #tpu.memory_space<vmem>>, %arg7: memref<1x128xf32, #tpu.memory_space<vmem>>, %arg8: memref<16x128xf32, #tpu.memory_space<vmem>>) attributes {dimension_semantics = [#tpu.dimension_semantics<parallel>], iteration_bounds = array<i64: 1>, scalar_prefetch = 0 : i64, scratch_operands = 0 : i64, tpu.core_type = #tpu.core_type<tc>, window_params = [{transform_indices = @transform_0, window_bounds = array<i64: 16, 32>}, {pipeline_mode = #tpu.pipeline_mode<synchronous>, transform_indices = @transform_1, window_bounds = array<i64: 32, 128>}, {pipeline_mode = #tpu.pipeline_mode<synchronous>, transform_indices = @transform_2, window_bounds = array<i64: 1, 128>}, {pipeline_mode = #tpu.pipeline_mode<synchronous>, transform_indices = @transform_3, window_bounds = array<i64: 128, 128>}, {pipeline_mode = #tpu.pipeline_mode<synchronous>, transform_indices = @transform_4, window_bounds = array<i64: 1, 128>}, {pipeline_mode = #tpu.pipeline_mode<synchronous>, transform_indices = @transform_5, window_bounds = array<i64: 128, 128>}, {pipeline_mode = #tpu.pipeline_mode<synchronous>, transform_indices = @transform_6, window_bounds = array<i64: 1, 128>}, {transform_indices = @transform_7, window_bounds = array<i64: 16, 128>}]} {
    %c0 = arith.constant 0 : index
    %c0_0 = arith.constant 0 : index
    %0 = vector.load %arg1[%c0, %c0_0] : memref<16x32xf32, #tpu.memory_space<vmem>>, vector<16x32xf32>
    %1 = arith.truncf %0 : vector<16x32xf32> to vector<16x32xbf16>
    %c0_1 = arith.constant 0 : index
    %c0_2 = arith.constant 0 : index
    %2 = vector.load %arg2[%c0_1, %c0_2] : memref<32x128xbf16, #tpu.memory_space<vmem>>, vector<32x128xbf16>
    %cst = arith.constant dense<0.000000e+00> : vector<16x128xf32>
    %3 = tpu.matmul %1, %2, %cst {dimension_numbers = #tpu.dot_dimension_numbers<[1], [0], [0], [1], [0, 0, 1, 1], [], []>} : vector<16x32xbf16>, vector<32x128xbf16>, vector<16x128xf32> -> vector<16x128xf32>
    %c0_3 = arith.constant 0 : index
    %c0_4 = arith.constant 0 : index
    %4 = vector.load %arg3[%c0_3, %c0_4] : memref<1x128xf32, #tpu.memory_space<vmem>>, vector<1x128xf32>
    %5 = vector.broadcast %4 : vector<1x128xf32> to vector<16x128xf32>
    %6 = arith.addf %3, %5 : vector<16x128xf32>
    %cst_5 = arith.constant 5.000000e-01 : f32
    %7 = vector.broadcast %cst_5 : f32 to vector<16x128xf32>
    %8 = arith.mulf %7, %6 : vector<16x128xf32>
    %9 = math.tanh %8 : vector<16x128xf32>
    %cst_6 = arith.constant 5.000000e-01 : f32
    %10 = vector.broadcast %cst_6 : f32 to vector<16x128xf32>
    %11 = arith.mulf %10, %9 : vector<16x128xf32>
    %cst_7 = arith.constant 5.000000e-01 : f32
    %12 = vector.broadcast %cst_7 : f32 to vector<16x128xf32>
    %13 = arith.addf %11, %12 : vector<16x128xf32>
    %14 = arith.truncf %13 : vector<16x128xf32> to vector<16x128xbf16>
    %c0_8 = arith.constant 0 : index
    %c0_9 = arith.constant 0 : index
    %15 = vector.load %arg4[%c0_8, %c0_9] : memref<128x128xbf16, #tpu.memory_space<vmem>>, vector<128x128xbf16>
    %cst_10 = arith.constant dense<0.000000e+00> : vector<16x128xf32>
    %16 = tpu.matmul %14, %15, %cst_10 {dimension_numbers = #tpu.dot_dimension_numbers<[1], [0], [0], [1], [0, 0, 1, 1], [], []>} : vector<16x128xbf16>, vector<128x128xbf16>, vector<16x128xf32> -> vector<16x128xf32>
    %c0_11 = arith.constant 0 : index
    %c0_12 = arith.constant 0 : index
    %17 = vector.load %arg5[%c0_11, %c0_12] : memref<1x128xf32, #tpu.memory_space<vmem>>, vector<1x128xf32>
    %18 = vector.broadcast %17 : vector<1x128xf32> to vector<16x128xf32>
    %19 = arith.addf %16, %18 : vector<16x128xf32>
    %cst_13 = arith.constant 5.000000e-01 : f32
    %20 = vector.broadcast %cst_13 : f32 to vector<16x128xf32>
    %21 = arith.mulf %20, %19 : vector<16x128xf32>
    %22 = math.tanh %21 : vector<16x128xf32>
    %cst_14 = arith.constant 5.000000e-01 : f32
    %23 = vector.broadcast %cst_14 : f32 to vector<16x128xf32>
    %24 = arith.mulf %23, %22 : vector<16x128xf32>
    %cst_15 = arith.constant 5.000000e-01 : f32
    %25 = vector.broadcast %cst_15 : f32 to vector<16x128xf32>
    %26 = arith.addf %24, %25 : vector<16x128xf32>
    %27 = arith.truncf %26 : vector<16x128xf32> to vector<16x128xbf16>
    %c0_16 = arith.constant 0 : index
    %c0_17 = arith.constant 0 : index
    %28 = vector.load %arg6[%c0_16, %c0_17] : memref<128x128xbf16, #tpu.memory_space<vmem>>, vector<128x128xbf16>
    %cst_18 = arith.constant dense<0.000000e+00> : vector<16x128xf32>
    %29 = tpu.matmul %27, %28, %cst_18 {dimension_numbers = #tpu.dot_dimension_numbers<[1], [0], [0], [1], [0, 0, 1, 1], [], []>} : vector<16x128xbf16>, vector<128x128xbf16>, vector<16x128xf32> -> vector<16x128xf32>
    %c0_19 = arith.constant 0 : index
    %c0_20 = arith.constant 0 : index
    %30 = vector.load %arg7[%c0_19, %c0_20] : memref<1x128xf32, #tpu.memory_space<vmem>>, vector<1x128xf32>
    %31 = vector.broadcast %30 : vector<1x128xf32> to vector<16x128xf32>
    %32 = arith.addf %29, %31 : vector<16x128xf32>
    %cst_21 = arith.constant 5.000000e-01 : f32
    %33 = vector.broadcast %cst_21 : f32 to vector<16x128xf32>
    %34 = arith.mulf %33, %32 : vector<16x128xf32>
    %35 = math.tanh %34 : vector<16x128xf32>
    %cst_22 = arith.constant 5.000000e-01 : f32
    %36 = vector.broadcast %cst_22 : f32 to vector<16x128xf32>
    %37 = arith.mulf %36, %35 : vector<16x128xf32>
    %cst_23 = arith.constant 5.000000e-01 : f32
    %38 = vector.broadcast %cst_23 : f32 to vector<16x128xf32>
    %39 = arith.addf %37, %38 : vector<16x128xf32>
    %c0_24 = arith.constant 0 : index
    %c0_25 = arith.constant 0 : index
    %40 = vector.load %arg8[%c0_24, %c0_25] : memref<16x128xf32, #tpu.memory_space<vmem>>, vector<16x128xf32>
    tpu.vector_store %arg8[%c0_24, %c0_25], %39 {strides = array<i32>} : memref<16x128xf32, #tpu.memory_space<vmem>>, vector<16x128xf32>,
    return
  }
  func.func @transform_0(%arg0: i32) -> (i32, i32) {
    %c0_i32 = arith.constant 0 : i32
    %c0_i32_0 = arith.constant 0 : i32
    return %arg0, %c0_i32 : i32, i32
  }
  func.func @transform_1(%arg0: i32) -> (i32, i32) {
    %c0_i32 = arith.constant 0 : i32
    %c0_i32_0 = arith.constant 0 : i32
    %c0_i32_1 = arith.constant 0 : i32
    return %c0_i32, %c0_i32_0 : i32, i32
  }
  func.func @transform_2(%arg0: i32) -> (i32, i32) {
    %c0_i32 = arith.constant 0 : i32
    %c0_i32_0 = arith.constant 0 : i32
    %c0_i32_1 = arith.constant 0 : i32
    return %c0_i32, %c0_i32_0 : i32, i32
  }
  func.func @transform_3(%arg0: i32) -> (i32, i32) {
    %c0_i32 = arith.constant 0 : i32
    %c0_i32_0 = arith.constant 0 : i32
    %c0_i32_1 = arith.constant 0 : i32
    return %c0_i32, %c0_i32_0 : i32, i32
  }
  func.func @transform_4(%arg0: i32) -> (i32, i32) {
    %c0_i32 = arith.constant 0 : i32
    %c0_i32_0 = arith.constant 0 : i32
    %c0_i32_1 = arith.constant 0 : i32
    return %c0_i32, %c0_i32_0 : i32, i32
  }
  func.func @transform_5(%arg0: i32) -> (i32, i32) {
    %c0_i32 = arith.constant 0 : i32
    %c0_i32_0 = arith.constant 0 : i32
    %c0_i32_1 = arith.constant 0 : i32
    return %c0_i32, %c0_i32_0 : i32, i32
  }
  func.func @transform_6(%arg0: i32) -> (i32, i32) {
    %c0_i32 = arith.constant 0 : i32
    %c0_i32_0 = arith.constant 0 : i32
    %c0_i32_1 = arith.constant 0 : i32
    return %c0_i32, %c0_i32_0 : i32, i32
  }
  func.func @transform_7(%arg0: i32) -> (i32, i32) {
    %c0_i32 = arith.constant 0 : i32
    %c0_i32_0 = arith.constant 0 : i32
    return %arg0, %c0_i32 : i32, i32
  }
}

</mosaic_0001>

<llo_original>
// kernel: tpu_custom_call.1
$region0: #{tpu_custom_call.1}
  #allocation0 [shape = 'u32[]', space=smem, size = 0x4, offset = 0x4, fixed_abs, tag = 'smem constant byte address 0x4 - core index']
  #allocation1 [shape = 'u32[144,128]{1,0:T(1,128)}', space=vmem, size = 0x12000, scoped, tag = 'internal scratch']
  %s0 = inlined_call_operand.hbm [shape: f32[16,32], index: 0, kind: input, shape index: {}]
  %s1 = inlined_call_operand.hbm [shape: bf16[32,128], index: 1, kind: input, shape index: {}]
  %s2 = inlined_call_operand.vmem [shape: f32[1,128], index: 2, kind: input, shape index: {}]
  %s3 = inlined_call_operand.hbm [shape: bf16[128,128], index: 3, kind: input, shape index: {}]
  %s4 = inlined_call_operand.vmem [shape: f32[1,128], index: 4, kind: input, shape index: {}]
  %s5 = inlined_call_operand.hbm [shape: bf16[128,128], index: 5, kind: input, shape index: {}]
  %s6 = inlined_call_operand.vmem [shape: f32[1,128], index: 6, kind: input, shape index: {}]
  %s7 = inlined_call_operand.hbm [shape: f32[16,128], index: 7, kind: output, shape index: {}]
  %s8 = sld [smem:[#allocation0]]
  $region54: #{tpu_custom_call.1} parent=0
    _
  %s10 = ssub.s32 1, %s8
  %s11 = scalar_select 0, %s10, %s8
  $region1: #{tpu_custom_call.1} parent=0
    #allocation2 [shape = 'u8[8192]{0}', space=vmem, size = 0x2000, scoped, tag = 'input window, operand 0, single buffered']
    #allocation3 [shape = 's32[1]{0}', space=sflag, size = 0x4, scoped, tag = 'scoped memory for tpu_custom_call.1']
    #allocation4 [shape = 's32[1]{0}', space=sflag, size = 0x4, scoped, tag = 'scoped memory for tpu_custom_call.1']
    #allocation5 [shape = 'u8[8192]{0}', space=vmem, size = 0x2000, scoped, tag = 'input window, operand 1, single buffered']
    #allocation6 [shape = 's32[1]{0}', space=sflag, size = 0x4, scoped, tag = 'scoped memory for tpu_custom_call.1']
    #allocation7 [shape = 'u8[32768]{0}', space=vmem, size = 0x8000, scoped, tag = 'input window, operand 3, single buffered']
    #allocation8 [shape = 'u8[32768]{0}', space=vmem, size = 0x8000, scoped, tag = 'input window, operand 5, single buffered']
    #allocation9 [shape = 's32[1]{0}', space=sflag, size = 0x4, scoped, tag = 'scoped memory for tpu_custom_call.1']
    #allocation10 [shape = 'u8[8192]{0}', space=vmem, size = 0x2000, scoped, tag = 'output window, operand 0, single buffered']
    %12 = vsyncpa [#allocation3], 0
    %13 = vsyncpa [#allocation6], 0
    %14 = vsyncpa [#allocation9], 0
    %15 = vsyncpa [#allocation4], 0
    // Predicated region
    $region2: #{tpu_custom_call.1} parent=1 // pred_check
      _
    $region3: #{tpu_custom_call.1} parent=1 // pred_check_branch
      %17 = sbr.rel (0) target = $region5
    $region4: #{tpu_custom_call.1} parent=1 // pred_region
      %s19 = ssub.s32 256, 256
      %20 = vsyncadd [#allocation3], %s19
      %s21 = sshll.u32 [#allocation2], 4
      %s22 = int_to_ptr.vmem [resolvable:$true] %s21
      %27 = dma.hbm_to_vmem [thread:$0]  %s0, 256, %s22, [#allocation3], 128, 128, 8
    $region5: #{tpu_custom_call.1} parent=1 // pred_fallthru
      _
    // Predicated region
    $region6: #{tpu_custom_call.1} parent=1 // pred_check
      _
    $region7: #{tpu_custom_call.1} parent=1 // pred_check_branch
      %29 = sbr.rel (0) target = $region9
    $region8: #{tpu_custom_call.1} parent=1 // pred_region
      %s31 = ssub.s32 256, 256
      %32 = vsyncadd [#allocation6], %s31
      %s33 = sshll.u32 [#allocation5], 4
      %s34 = int_to_ptr.vmem [resolvable:$true] %s33
      %39 = dma.hbm_to_vmem [thread:$0]  %s1, 256, %s34, [#allocation6], 64, 64, 4
    $region9: #{tpu_custom_call.1} parent=1 // pred_fallthru
      _
    // Predicated region
    $region10: #{tpu_custom_call.1} parent=1 // pred_check
      _
    $region11: #{tpu_custom_call.1} parent=1 // pred_check_branch
      %41 = sbr.rel (0) target = $region13
    $region12: #{tpu_custom_call.1} parent=1 // pred_region
      _
    $region13: #{tpu_custom_call.1} parent=1 // pred_fallthru
      _
    // Predicated region
    $region14: #{tpu_custom_call.1} parent=1 // pred_check
      _
    $region15: #{tpu_custom_call.1} parent=1 // pred_check_branch
      %43 = sbr.rel (0) target = $region17
    $region16: #{tpu_custom_call.1} parent=1 // pred_region
      %s45 = ssub.s32 1024, 1024
      %46 = vsyncadd [#allocation6], %s45
      %s47 = sshll.u32 [#allocation7], 4
      %s48 = int_to_ptr.vmem [resolvable:$true] %s47
      %53 = dma.hbm_to_vmem [thread:$0]  %s3, 1024, %s48, [#allocation6], 64, 64, 4
    $region17: #{tpu_custom_call.1} parent=1 // pred_fallthru
      _
    // Predicated region
    $region18: #{tpu_custom_call.1} parent=1 // pred_check
      _
    $region19: #{tpu_custom_call.1} parent=1 // pred_check_branch
      %55 = sbr.rel (0) target = $region21
    $region20: #{tpu_custom_call.1} parent=1 // pred_region
      _
    $region21: #{tpu_custom_call.1} parent=1 // pred_fallthru
      _
    // Predicated region
    $region22: #{tpu_custom_call.1} parent=1 // pred_check
      _
    $region23: #{tpu_custom_call.1} parent=1 // pred_check_branch
      %57 = sbr.rel (0) target = $region25
    $region24: #{tpu_custom_call.1} parent=1 // pred_region
      %s59 = ssub.s32 1024, 1024
      %60 = vsyncadd [#allocation9], %s59
      %s61 = sshll.u32 [#allocation8], 4
      %s62 = int_to_ptr.vmem [resolvable:$true] %s61
      %67 = dma.hbm_to_vmem [thread:$0]  %s5, 1024, %s62, [#allocation9], 64, 64, 4
    $region25: #{tpu_custom_call.1} parent=1 // pred_fallthru
      _
    // Predicated region
    $region26: #{tpu_custom_call.1} parent=1 // pred_check
      _
    $region27: #{tpu_custom_call.1} parent=1 // pred_check_branch
      %69 = sbr.rel (0) target = $region29
    $region28: #{tpu_custom_call.1} parent=1 // pred_region
      _
    $region29: #{tpu_custom_call.1} parent=1 // pred_fallthru
      _
    // Predicated region
    $region30: #{tpu_custom_call.1} parent=1 // pred_check
      _
    $region31: #{tpu_custom_call.1} parent=1 // pred_check_branch
      %71 = sbr.rel (0) target = $region33
    $region32: #{tpu_custom_call.1} parent=1 // pred_region
      %72 = dma.done [#allocation3], 256
    $region33: #{tpu_custom_call.1} parent=1 // pred_fallthru
      _
    // Predicated region
    $region34: #{tpu_custom_call.1} parent=1 // pred_check
      _
    $region35: #{tpu_custom_call.1} parent=1 // pred_check_branch
      %74 = sbr.rel (0) target = $region37
    $region36: #{tpu_custom_call.1} parent=1 // pred_region
      %75 = dma.done [#allocation6], 256
    $region37: #{tpu_custom_call.1} parent=1 // pred_fallthru
      _
    // Predicated region
    $region38: #{tpu_custom_call.1} parent=1 // pred_check
      _
    $region39: #{tpu_custom_call.1} parent=1 // pred_check_branch
      %77 = sbr.rel (0) target = $region41
    $region40: #{tpu_custom_call.1} parent=1 // pred_region
      %78 = dma.done [#allocation6], 1024
    $region41: #{tpu_custom_call.1} parent=1 // pred_fallthru
      _
    // Predicated region
    $region42: #{tpu_custom_call.1} parent=1 // pred_check
      _
    $region43: #{tpu_custom_call.1} parent=1 // pred_check_branch
      %80 = sbr.rel (0) target = $region45
    $region44: #{tpu_custom_call.1} parent=1 // pred_region
      %81 = dma.done [#allocation9], 1024
    $region45: #{tpu_custom_call.1} parent=1 // pred_fallthru
      _
    %v83 = vld [vmem:[#allocation2] sm:$0xff]
    %v84 = vld [vmem:[#allocation2 + $0x8] sm:$0xff]
    %v85 = vpack.c.bf16 %v84, %v83
    %v86 = vld [vmem:[#allocation5] sm:$0xf]
    %v87 = vld [vmem:[#allocation5 + $0x4] sm:$0xf]
    %v88 = vld [vmem:[#allocation5 + $0x8] sm:$0xf]
    %v89 = vld [vmem:[#allocation5 + $0xc] sm:$0xf]
    %v90 = vld [vmem:[%s2] sm:$0x1]
    %v92 = vlaneseq
    %v93 = vshrl.u32 %v92, 7
    %v94 = vsub.s32 0, %v93
    %v95 = vrot.slane %v90, %v94
    %v101 = vunpack.c.l.b16 %v86
    %v102 = vunpack.c.l.b16 %v87
    %v103 = vunpack.c.l.b16 %v88
    %v104 = vunpack.c.l.b16 %v89
    %v105 = vpack.c.b16 %v102, %v101
    %v106 = vpack.c.b16 %v104, %v103
    %vm109 = vcmask 261120
    %v111 = vsel %vm109, %v85, 0
    %113 = vmatprep.subr.bf16.mxu0 0
    %114 = vmatpush1.bf16.msra.mxu0 %v105
    %115 = vmatprep.subr.bf16.mxu0 0
    %116 = vmatpush1.bf16.msra.mxu0 %v106
    %117 = vmatprep.subr.bf16.mxu0 0
    %118 = vmatpush1.bf16.msra.mxu0 0
    %119 = vmatprep.subr.bf16.mxu0 0
    %120 = vmatpush1.bf16.msra.mxu0 0
    %121 = vmatprep.subr.bf16.mxu0 0
    %122 = vmatpush1.bf16.msra.mxu0 0
    %123 = vmatprep.subr.bf16.mxu0 0
    %124 = vmatpush1.bf16.msra.mxu0 0
    %125 = vmatprep.subr.bf16.mxu0 0
    %126 = vmatpush1.bf16.msra.mxu0 0
    %127 = vmatprep.subr.bf16.mxu0 0
    %128 = vmatpush1.bf16.msra.mxu0 0
    %129 = vmatprep.subr.bf16.mxu0 0
    %130 = vmatpush1.bf16.msra.mxu0 0
    %131 = vmatprep.subr.bf16.mxu0 0
    %132 = vmatpush1.bf16.msra.mxu0 0
    %133 = vmatprep.subr.bf16.mxu0 0
    %134 = vmatpush1.bf16.msra.mxu0 0
    %135 = vmatprep.subr.bf16.mxu0 0
    %136 = vmatpush1.bf16.msra.mxu0 0
    %137 = vmatprep.subr.bf16.mxu0 0
    %138 = vmatpush1.bf16.msra.mxu0 0
    %139 = vmatprep.subr.bf16.mxu0 0
    %140 = vmatpush1.bf16.msra.mxu0 0
    %141 = vmatprep.subr.bf16.mxu0 0
    %142 = vmatpush1.bf16.msra.mxu0 0
    %143 = vmatprep.subr.bf16.mxu0 0
    %144 = vmatpush1.bf16.msra.mxu0 0
    %145 = vmatprep.mubr.bf16.mxu0 0
    %146 = vmatmul.mubr.bf16.gmra.mrb[0].mxu0 %v111
    %v147 = vpop.f32.mrb[0].mxu0
    %v148 = vadd.f32 %v95, %v147
    %v149 = vpop.f32.mrb[0].mxu0
    %v150 = vpop.f32.mrb[0].mxu0
    %v151 = vadd.f32 %v95, %v150
    %v152 = vpop.f32.mrb[0].mxu0
    %153 = vdwg.mxu0
    %v154 = vmul.f32 %v148, 0.5
    %v155 = vmul.f32 %v151, 0.5
    %v156 = vtanh.pop %v154
    %v157 = vtanh.pop %v155
    %v158 = vmul.f32 %v156, 0.5
    %v159 = vmul.f32 %v157, 0.5
    %v160 = vadd.f32 %v158, 0.5
    %v161 = vadd.f32 %v159, 0.5
    %v162 = vpack.c.bf16 %v161, %v160
    %v163 = vld [vmem:[#allocation7] sm:$0xf]
    %v164 = vld [vmem:[#allocation7 + $0x4] sm:$0xf]
    %v165 = vld [vmem:[#allocation7 + $0x8] sm:$0xf]
    %v166 = vld [vmem:[#allocation7 + $0xc] sm:$0xf]
    %v167 = vld [vmem:[#allocation7 + $0x10] sm:$0xf]
    %v168 = vld [vmem:[#allocation7 + $0x14] sm:$0xf]
    %v169 = vld [vmem:[#allocation7 + $0x18] sm:$0xf]
    %v170 = vld [vmem:[#allocation7 + $0x1c] sm:$0xf]
    %v171 = vld [vmem:[#allocation7 + $0x20] sm:$0xf]
    %v172 = vld [vmem:[#allocation7 + $0x24] sm:$0xf]
    %v173 = vld [vmem:[#allocation7 + $0x28] sm:$0xf]
    %v174 = vld [vmem:[#allocation7 + $0x2c] sm:$0xf]
    %v175 = vld [vmem:[#allocation7 + $0x30] sm:$0xf]
    %v176 = vld [vmem:[#allocation7 + $0x34] sm:$0xf]
    %v177 = vld [vmem:[#allocation7 + $0x38] sm:$0xf]
    %v178 = vld [vmem:[#allocation7 + $0x3c] sm:$0xf]
    %v179 = vld [vmem:[%s4] sm:$0x1]
    %v181 = vlaneseq
    %v182 = vshrl.u32 %v181, 7
    %v183 = vsub.s32 0, %v182
    %v184 = vrot.slane %v179, %v183
    %v202 = vunpack.c.l.b16 %v163
    %v203 = vunpack.c.l.b16 %v164
    %v204 = vunpack.c.l.b16 %v165
    %v205 = vunpack.c.l.b16 %v166
    %v206 = vunpack.c.l.b16 %v167
    %v207 = vunpack.c.l.b16 %v168
    %v208 = vunpack.c.l.b16 %v169
    %v209 = vunpack.c.l.b16 %v170
    %v210 = vunpack.c.l.b16 %v171
    %v211 = vunpack.c.l.b16 %v172
    %v212 = vunpack.c.l.b16 %v173
    %v213 = vunpack.c.l.b16 %v174
    %v214 = vunpack.c.l.b16 %v175
    %v215 = vunpack.c.l.b16 %v176
    %v216 = vunpack.c.l.b16 %v177
    %v217 = vunpack.c.l.b16 %v178
    %v218 = vpack.c.b16 %v203, %v202
    %v219 = vpack.c.b16 %v205, %v204
    %v220 = vpack.c.b16 %v207, %v206
    %v221 = vpack.c.b16 %v209, %v208
    %v222 = vpack.c.b16 %v211, %v210
    %v223 = vpack.c.b16 %v213, %v212
    %v224 = vpack.c.b16 %v215, %v214
    %v225 = vpack.c.b16 %v217, %v216
    %234 = vmatprep.subr.bf16.mxu0 0
    %235 = vmatpush1.bf16.msra.mxu0 %v218
    %236 = vmatprep.subr.bf16.mxu0 0
    %237 = vmatpush1.bf16.msra.mxu0 %v219
    %238 = vmatprep.subr.bf16.mxu0 0
    %239 = vmatpush1.bf16.msra.mxu0 %v220
    %240 = vmatprep.subr.bf16.mxu0 0
    %241 = vmatpush1.bf16.msra.mxu0 %v221
    %242 = vmatprep.subr.bf16.mxu0 0
    %243 = vmatpush1.bf16.msra.mxu0 %v222
    %244 = vmatprep.subr.bf16.mxu0 0
    %245 = vmatpush1.bf16.msra.mxu0 %v223
    %246 = vmatprep.subr.bf16.mxu0 0
    %247 = vmatpush1.bf16.msra.mxu0 %v224
    %248 = vmatprep.subr.bf16.mxu0 0
    %249 = vmatpush1.bf16.msra.mxu0 %v225
    %250 = vmatprep.subr.bf16.mxu0 0
    %251 = vmatpush1.bf16.msra.mxu0 0
    %252 = vmatprep.subr.bf16.mxu0 0
    %253 = vmatpush1.bf16.msra.mxu0 0
    %254 = vmatprep.subr.bf16.mxu0 0
    %255 = vmatpush1.bf16.msra.mxu0 0
    %256 = vmatprep.subr.bf16.mxu0 0
    %257 = vmatpush1.bf16.msra.mxu0 0
    %258 = vmatprep.subr.bf16.mxu0 0
    %259 = vmatpush1.bf16.msra.mxu0 0
    %260 = vmatprep.subr.bf16.mxu0 0
    %261 = vmatpush1.bf16.msra.mxu0 0
    %262 = vmatprep.subr.bf16.mxu0 0
    %263 = vmatpush1.bf16.msra.mxu0 0
    %264 = vmatprep.subr.bf16.mxu0 0
    %265 = vmatpush1.bf16.msra.mxu0 0
    %266 = vmatprep.mubr.bf16.mxu0 0
    %267 = vmatmul.mubr.bf16.gmra.mrb[0].mxu0 %v162
    %v268 = vpop.f32.mrb[0].mxu0
    %v269 = vadd.f32 %v184, %v268
    %v270 = vpop.f32.mrb[0].mxu0
    %v271 = vpop.f32.mrb[0].mxu0
    %v272 = vadd.f32 %v184, %v271
    %v273 = vpop.f32.mrb[0].mxu0
    %274 = vdwg.mxu0
    %v275 = vmul.f32 %v269, 0.5
    %v276 = vmul.f32 %v272, 0.5
    %v277 = vtanh.pop %v275
    %v278 = vtanh.pop %v276
    %v279 = vmul.f32 %v277, 0.5
    %v280 = vmul.f32 %v278, 0.5
    %v281 = vadd.f32 %v279, 0.5
    %v282 = vadd.f32 %v280, 0.5
    %v283 = vpack.c.bf16 %v282, %v281
    %v284 = vld [vmem:[#allocation8] sm:$0xf]
    %v285 = vld [vmem:[#allocation8 + $0x4] sm:$0xf]
    %v286 = vld [vmem:[#allocation8 + $0x8] sm:$0xf]
    %v287 = vld [vmem:[#allocation8 + $0xc] sm:$0xf]
    %v288 = vld [vmem:[#allocation8 + $0x10] sm:$0xf]
    %v289 = vld [vmem:[#allocation8 + $0x14] sm:$0xf]
    %v290 = vld [vmem:[#allocation8 + $0x18] sm:$0xf]
    %v291 = vld [vmem:[#allocation8 + $0x1c] sm:$0xf]
    %v292 = vld [vmem:[#allocation8 + $0x20] sm:$0xf]
    %v293 = vld [vmem:[#allocation8 + $0x24] sm:$0xf]
    %v294 = vld [vmem:[#allocation8 + $0x28] sm:$0xf]
    %v295 = vld [vmem:[#allocation8 + $0x2c] sm:$0xf]
    %v296 = vld [vmem:[#allocation8 + $0x30] sm:$0xf]
    %v297 = vld [vmem:[#allocation8 + $0x34] sm:$0xf]
    %v298 = vld [vmem:[#allocation8 + $0x38] sm:$0xf]
    %v299 = vld [vmem:[#allocation8 + $0x3c] sm:$0xf]
    %v300 = vld [vmem:[%s6] sm:$0x1]
    %v302 = vlaneseq
    %v303 = vshrl.u32 %v302, 7
    %v304 = vsub.s32 0, %v303
    %v305 = vrot.slane %v300, %v304
    %v323 = vunpack.c.l.b16 %v284
    %v324 = vunpack.c.l.b16 %v285
    %v325 = vunpack.c.l.b16 %v286
    %v326 = vunpack.c.l.b16 %v287
    %v327 = vunpack.c.l.b16 %v288
    %v328 = vunpack.c.l.b16 %v289
    %v329 = vunpack.c.l.b16 %v290
    %v330 = vunpack.c.l.b16 %v291
    %v331 = vunpack.c.l.b16 %v292
    %v332 = vunpack.c.l.b16 %v293
    %v333 = vunpack.c.l.b16 %v294
    %v334 = vunpack.c.l.b16 %v295
    %v335 = vunpack.c.l.b16 %v296
    %v336 = vunpack.c.l.b16 %v297
    %v337 = vunpack.c.l.b16 %v298
    %v338 = vunpack.c.l.b16 %v299
    %v339 = vpack.c.b16 %v324, %v323
    %v340 = vpack.c.b16 %v326, %v325
    %v341 = vpack.c.b16 %v328, %v327
    %v342 = vpack.c.b16 %v330, %v329
    %v343 = vpack.c.b16 %v332, %v331
    %v344 = vpack.c.b16 %v334, %v333
    %v345 = vpack.c.b16 %v336, %v335
    %v346 = vpack.c.b16 %v338, %v337
    %355 = vmatprep.subr.bf16.mxu0 0
    %356 = vmatpush1.bf16.msra.mxu0 %v339
    %357 = vmatprep.subr.bf16.mxu0 0
    %358 = vmatpush1.bf16.msra.mxu0 %v340
    %359 = vmatprep.subr.bf16.mxu0 0
    %360 = vmatpush1.bf16.msra.mxu0 %v341
    %361 = vmatprep.subr.bf16.mxu0 0
    %362 = vmatpush1.bf16.msra.mxu0 %v342
    %363 = vmatprep.subr.bf16.mxu0 0
    %364 = vmatpush1.bf16.msra.mxu0 %v343
    %365 = vmatprep.subr.bf16.mxu0 0
    %366 = vmatpush1.bf16.msra.mxu0 %v344
    %367 = vmatprep.subr.bf16.mxu0 0
    %368 = vmatpush1.bf16.msra.mxu0 %v345
    %369 = vmatprep.subr.bf16.mxu0 0
    %370 = vmatpush1.bf16.msra.mxu0 %v346
    %371 = vmatprep.subr.bf16.mxu0 0
    %372 = vmatpush1.bf16.msra.mxu0 0
    %373 = vmatprep.subr.bf16.mxu0 0
    %374 = vmatpush1.bf16.msra.mxu0 0
    %375 = vmatprep.subr.bf16.mxu0 0
    %376 = vmatpush1.bf16.msra.mxu0 0
    %377 = vmatprep.subr.bf16.mxu0 0
    %378 = vmatpush1.bf16.msra.mxu0 0
    %379 = vmatprep.subr.bf16.mxu0 0
    %380 = vmatpush1.bf16.msra.mxu0 0
    %381 = vmatprep.subr.bf16.mxu0 0
    %382 = vmatpush1.bf16.msra.mxu0 0
    %383 = vmatprep.subr.bf16.mxu0 0
    %384 = vmatpush1.bf16.msra.mxu0 0
    %385 = vmatprep.subr.bf16.mxu0 0
    %386 = vmatpush1.bf16.msra.mxu0 0
    %387 = vmatprep.mubr.bf16.mxu0 0
    %388 = vmatmul.mubr.bf16.gmra.mrb[0].mxu0 %v283
    %v389 = vpop.f32.mrb[0].mxu0
    %v390 = vadd.f32 %v305, %v389
    %v391 = vpop.f32.mrb[0].mxu0
    %v392 = vpop.f32.mrb[0].mxu0
    %v393 = vadd.f32 %v305, %v392
    %v394 = vpop.f32.mrb[0].mxu0
    %395 = vdwg.mxu0
    %v396 = vmul.f32 %v390, 0.5
    %v397 = vmul.f32 %v393, 0.5
    %v398 = vtanh.pop %v396
    %v399 = vtanh.pop %v397
    %v400 = vmul.f32 %v398, 0.5
    %v401 = vmul.f32 %v399, 0.5
    %v402 = vadd.f32 %v400, 0.5
    %v403 = vadd.f32 %v401, 0.5
    %404 = vst [vmem:[#allocation10] sm:$0xff] %v402
    %405 = vst [vmem:[#allocation10 + $0x8] sm:$0xff] %v403
    // Predicated region
    $region46: #{tpu_custom_call.1} parent=1 // pred_check
      _
    $region47: #{tpu_custom_call.1} parent=1 // pred_check_branch
      %407 = sbr.rel (0) target = $region49
    $region48: #{tpu_custom_call.1} parent=1 // pred_region
      %s409 = ssub.s32 256, 256
      %410 = vsyncadd [#allocation4], %s409
      %s411 = sshll.u32 [#allocation10], 4
      %s412 = int_to_ptr.vmem [resolvable:$true] %s411
      %417 = dma.vmem_to_hbm [thread:$0]  %s412, 256, %s7, [#allocation4], 128, 128, 8
    $region49: #{tpu_custom_call.1} parent=1 // pred_fallthru
      _
    // Predicated region
    $region50: #{tpu_custom_call.1} parent=1 // pred_check
      _
    $region51: #{tpu_custom_call.1} parent=1 // pred_check_branch
      %419 = sbr.rel (0) target = $region53
    $region52: #{tpu_custom_call.1} parent=1 // pred_region
      %420 = dma.done [#allocation4], 256
    $region53: #{tpu_custom_call.1} parent=1 // pred_fallthru
      _
    %421 = vsyncpa [#allocation3], 1
    %422 = vsyncpa [#allocation6], 1
    %423 = vsyncpa [#allocation9], 1
    %424 = vsyncpa [#allocation4], 1

</llo_original>
